<compile_context>
chip_gen: v7x
topology: tpu7x:2x2x1
jax: 0.10.0
libtpu: 0.0.40
codegen_flags: <defaults>
</compile_context>

<pallas_src>
import functools

import jax
import jax.numpy as jnp
from jax import lax
from jax.experimental import pallas as pl
from jax.experimental.pallas import tpu as pltpu


def _self_attention_kernel(q_ref, k_ref, v_ref, w_ref, b_ref, o_ref, acc_ref,
                           *, heads):
    block_b, S, D = q_ref.shape
    Dh = D // heads
    mm_dtype = w_ref.dtype          # bf16 by default (MXU-native)

    # ---- Fused all-head projections: one (block_b*S, D) @ (D, D) per input.
    def project(x_ref, idx):
        x = x_ref[...].reshape(block_b * S, D).astype(mm_dtype)
        y = jnp.dot(x, w_ref[idx], preferred_element_type=jnp.float32)
        y = y + b_ref[idx]          # bias kept f32 (VPU add)
        return y.reshape(block_b, S, D)

    Q = project(q_ref, 0)
    K = project(k_ref, 1)
    V = project(v_ref, 2)

    # ---- Per-(batch-row, head) attention.  No 1/sqrt(Dh) scaling: the
    # reference PyTorch module omits it.
    for b in range(block_b):                      # static unroll, block_b small
        for h in range(heads):                    # static unroll, heads small
            lo = h * Dh
            Qh = Q[b, :, lo:lo + Dh].astype(mm_dtype)     # (S, Dh)
            Kh = K[b, :, lo:lo + Dh].astype(mm_dtype)     # (S, Dh)
            Vh = V[b, :, lo:lo + Dh]                      # (S, Dh) f32

            # scores = Qh @ Kh^T without a materialized transpose.
            scores = lax.dot_general(
                Qh, Kh, (((1,), (1,)), ((), ())),
                preferred_element_type=jnp.float32)       # (S, S) f32

            # Numerically stable softmax, all in f32 with an EXACT divide
            # (approx reciprocal removed — it broke 1e-3 parity).
            m = jnp.max(scores, axis=-1, keepdims=True)
            e = jnp.exp(scores - m)
            p = e / jnp.sum(e, axis=-1, keepdims=True)

            out_h = jnp.dot(p.astype(mm_dtype), Vh.astype(mm_dtype),
                            preferred_element_type=jnp.float32)  # (S, Dh) f32

            # Write this head's slice immediately (bounds live ranges), matching
            # torch.cat(split(..., B, 0), -1): head h -> columns h*Dh:(h+1)*Dh.
            acc_ref[:, lo:lo + Dh] = out_h

        # One full-width, lane-dense store per batch row.
        o_ref[b] = acc_ref[...].astype(o_ref.dtype)


def _pick_block_b(B, S, D):
    """Largest batch block whose four f32 (block_b, S, D) tiles stay under a
    modest VMEM budget while leaving >= 2 grid steps (v7x has 2 TensorCores)."""
    budget = 8 << 20
    best = 1
    for bb in range(1, B + 1):
        if B % bb:
            continue
        if 4 * bb * S * D * 4 > budget:
            continue
        if B >= 2 and B // bb < 2:
            continue
        best = bb
    return best


def _vmem_limit_bytes(block_b, S, D, matmul_dtype):
    """Size the scoped-VMEM limit from actual usage (+headroom), clamped."""
    mm_bytes = jnp.dtype(matmul_dtype).itemsize
    tiles = 4 * 2 * block_b * S * D * 4                  # q/k/v/out, double-buffered, f32
    weights = 2 * (3 * D * D * mm_bytes + 3 * D * 4)     # resident (double-buffered) W + b
    temps = (3 * block_b * S * D + S * D + 3 * S * S) * 4  # Q/K/V, scratch, score temps
    est = int(1.5 * (tiles + weights + temps)) + (4 << 20)
    # Floor at 32 MiB; cap at 96 MiB (v5e/v6e physical headroom).  On v7x
    # (64 MiB physical) very large D/S need query tiling, not a bigger limit.
    return max(32 << 20, min(est, 96 << 20))


def self_attention(q, k, v, params, heads, *, matmul_dtype=jnp.bfloat16,
                   block_b=None):
    """Pallas equivalent of SelfAttention.forward(q, k, v).

    params holds weights in (D_in, D_out) layout (i.e. torch Linear weight
    transposed) so that the projection is x @ W + b.
    """
    B, S, D = q.shape
    assert D % heads == 0, "d_model must be divisible by heads"
    if block_b is None:
        block_b = _pick_block_b(B, S, D)
    assert B % block_b == 0

    # Stack the three projections into single grid-resident inputs.
    w_qkv = jnp.stack([params["wq"], params["wk"], params["wv"]],
                      axis=0).astype(matmul_dtype)                 # (3, D, D)
    b_qkv = jnp.stack([params["bq"], params["bk"], params["bv"]],
                      axis=0).reshape(3, 1, D).astype(jnp.float32)  # (3, 1, D)

    grid = (B // block_b,)
    x_spec = pl.BlockSpec((block_b, S, D), lambda i: (i, 0, 0))
    # Grid-invariant index_maps: weights/biases are DMA'd once and stay resident.
    w_spec = pl.BlockSpec((3, D, D), lambda i: (0, 0, 0))
    bias_spec = pl.BlockSpec((3, 1, D), lambda i: (0, 0, 0))

    return pl.pallas_call(
        functools.partial(_self_attention_kernel, heads=heads),
        out_shape=jax.ShapeDtypeStruct((B, S, D), q.dtype),
        grid=grid,
        in_specs=[x_spec, x_spec, x_spec, w_spec, bias_spec],
        out_specs=pl.BlockSpec((block_b, S, D), lambda i: (i, 0, 0)),
        scratch_shapes=[pltpu.VMEM((S, D), jnp.float32)],
        compiler_params=pltpu.CompilerParams(
            dimension_semantics=("parallel",),
            vmem_limit_bytes=_vmem_limit_bytes(block_b, S, D, matmul_dtype)),
    )(q, k, v, w_qkv, b_qkv)


def self_attention_reference(q, k, v, params, heads, matmul_dtype=jnp.float32):
    """Pure-JAX replica of the PyTorch forward.  `matmul_dtype` lets us emulate
    the kernel's bf16-operand / f32-accumulate matmuls for tight comparison."""
    B, S, D = q.shape
    Dh = D // heads

    def dense(x, w, b):
        y = jnp.dot(x.reshape(B * S, D).astype(matmul_dtype),
                    w.astype(matmul_dtype),
                    preferred_element_type=jnp.float32).reshape(B, S, D)
        return y + b

    Q = dense(q, params["wq"], params["bq"])
    K = dense(k, params["wk"], params["bk"])
    V = dense(v, params["wv"], params["bv"])

    def heads_first(x):  # (B, S, D) -> (B, H, S, Dh); head h = cols h*Dh:(h+1)*Dh
        return x.reshape(B, S, heads, Dh).transpose(0, 2, 1, 3)

    Qh, Kh, Vh = heads_first(Q), heads_first(K), heads_first(V)
    scores = jnp.einsum("bhsd,bhtd->bhst",
                        Qh.astype(matmul_dtype), Kh.astype(matmul_dtype),
                        preferred_element_type=jnp.float32)
    p = jax.nn.softmax(scores, axis=-1)            # no 1/sqrt(Dh), as in torch
    out = jnp.einsum("bhst,bhtd->bhsd",
                     p.astype(matmul_dtype), Vh.astype(matmul_dtype),
                     preferred_element_type=jnp.float32)
    return out.transpose(0, 2, 1, 3).reshape(B, S, D).astype(q.dtype)


if __name__ == "__main__":
    B, S, D, HEADS = 2, 8, 32, 4

    key = jax.random.PRNGKey(0)
    kq, kk, kv, kwq, kwk, kwv, kbq, kbk, kbv = jax.random.split(key, 9)

    q = jax.random.normal(kq, (B, S, D), dtype=jnp.float32)
    k = jax.random.normal(kk, (B, S, D), dtype=jnp.float32)
    v = jax.random.normal(kv, (B, S, D), dtype=jnp.float32)

    scale = 1.0 / jnp.sqrt(jnp.float32(D))
    params = {
        "wq": jax.random.uniform(kwq, (D, D), jnp.float32, -scale, scale),
        "wk": jax.random.uniform(kwk, (D, D), jnp.float32, -scale, scale),
        "wv": jax.random.uniform(kwv, (D, D), jnp.float32, -scale, scale),
        "bq": jax.random.uniform(kbq, (D,), jnp.float32, -scale, scale),
        "bk": jax.random.uniform(kbk, (D,), jnp.float32, -scale, scale),
        "bv": jax.random.uniform(kbv, (D,), jnp.float32, -scale, scale),
    }

    out = jax.block_until_ready(self_attention(q, k, v, params, HEADS))
    assert out.shape == (B, S, D)
    assert jnp.all(jnp.isfinite(out)), "non-finite values in kernel output"

    # Tight check against a reference that does the same bf16-operand /
    # f32-accumulate matmuls as the kernel.
    ref_matched = self_attention_reference(q, k, v, params, HEADS,
                                           matmul_dtype=jnp.bfloat16)
    assert jnp.allclose(out, ref_matched, atol=2e-3, rtol=2e-3), \
        "mismatch vs matched-precision reference"

    # Looser check against the pure-f32 reference (the torch fp32 module);
    # the slack accounts only for the intentional bf16 MXU-operand cast.
    ref_f32 = self_attention_reference(q, k, v, params, HEADS,
                                       matmul_dtype=jnp.float32)
    assert jnp.allclose(out, ref_f32, atol=5e-2, rtol=5e-2), \
        "mismatch vs f32 reference"

    print("KERNEL_OK")
</pallas_src>

<mosaic_0001>
module attributes {stable_mosaic.version = 11 : i64} {
  func.func @_self_attention_kernel(%arg0: i32, %arg1: memref<1x8x32xf32, #tpu.memory_space<vmem>>, %arg2: memref<1x8x32xf32, #tpu.memory_space<vmem>>, %arg3: memref<1x8x32xf32, #tpu.memory_space<vmem>>, %arg4: memref<3x32x32xbf16, #tpu.memory_space<vmem>>, %arg5: memref<3x1x32xf32, #tpu.memory_space<vmem>>, %arg6: memref<1x8x32xf32, #tpu.memory_space<vmem>>, %arg7: memref<8x32xf32, #tpu.memory_space<vmem>>) attributes {dimension_semantics = [#tpu.dimension_semantics<parallel>], iteration_bounds = array<i64: 2>, scalar_prefetch = 0 : i64, scratch_operands = 1 : i64, tpu.core_type = #tpu.core_type<tc>, window_params = [{transform_indices = @transform_0, window_bounds = array<i64: 1, 8, 32>}, {transform_indices = @transform_1, window_bounds = array<i64: 1, 8, 32>}, {transform_indices = @transform_2, window_bounds = array<i64: 1, 8, 32>}, {pipeline_mode = #tpu.pipeline_mode<synchronous>, transform_indices = @transform_3, window_bounds = array<i64: 3, 32, 32>}, {pipeline_mode = #tpu.pipeline_mode<synchronous>, transform_indices = @transform_4, window_bounds = array<i64: 3, 1, 32>}, {transform_indices = @transform_5, window_bounds = array<i64: 1, 8, 32>}]} {
    %c0 = arith.constant 0 : index
    %c0_0 = arith.constant 0 : index
    %c0_1 = arith.constant 0 : index
    %0 = vector.load %arg1[%c0, %c0_0, %c0_1] : memref<1x8x32xf32, #tpu.memory_space<vmem>>, vector<1x8x32xf32>
    %1 = vector.shape_cast %0 : vector<1x8x32xf32> to vector<8x32xf32>
    %2 = arith.truncf %1 : vector<8x32xf32> to vector<8x32xbf16>
    %c0_2 = arith.constant 0 : index
    %c0_3 = arith.constant 0 : index
    %c0_4 = arith.constant 0 : index
    %3 = vector.load %arg4[%c0_2, %c0_3, %c0_4] : memref<3x32x32xbf16, #tpu.memory_space<vmem>>, vector<1x32x32xbf16>
    %4 = vector.shape_cast %3 : vector<1x32x32xbf16> to vector<32x32xbf16>
    %cst = arith.constant dense<0.000000e+00> : vector<8x32xf32>
    %5 = tpu.matmul %2, %4, %cst {dimension_numbers = #tpu.dot_dimension_numbers<[1], [0], [0], [1], [0, 0, 1, 1], [], []>} : vector<8x32xbf16>, vector<32x32xbf16>, vector<8x32xf32> -> vector<8x32xf32>
    %c0_5 = arith.constant 0 : index
    %c0_6 = arith.constant 0 : index
    %c0_7 = arith.constant 0 : index
    %6 = vector.load %arg5[%c0_5, %c0_6, %c0_7] : memref<3x1x32xf32, #tpu.memory_space<vmem>>, vector<1x1x32xf32>
    %7 = vector.shape_cast %6 : vector<1x1x32xf32> to vector<1x32xf32>
    %8 = vector.broadcast %7 : vector<1x32xf32> to vector<8x32xf32>
    %9 = arith.addf %5, %8 : vector<8x32xf32>
    %10 = vector.shape_cast %9 : vector<8x32xf32> to vector<1x8x32xf32>
    %c0_8 = arith.constant 0 : index
    %c0_9 = arith.constant 0 : index
    %c0_10 = arith.constant 0 : index
    %11 = vector.load %arg2[%c0_8, %c0_9, %c0_10] : memref<1x8x32xf32, #tpu.memory_space<vmem>>, vector<1x8x32xf32>
    %12 = vector.shape_cast %11 : vector<1x8x32xf32> to vector<8x32xf32>
    %13 = arith.truncf %12 : vector<8x32xf32> to vector<8x32xbf16>
    %c1 = arith.constant 1 : index
    %c0_11 = arith.constant 0 : index
    %c0_12 = arith.constant 0 : index
    %14 = vector.load %arg4[%c1, %c0_11, %c0_12] : memref<3x32x32xbf16, #tpu.memory_space<vmem>>, vector<1x32x32xbf16>
    %15 = vector.shape_cast %14 : vector<1x32x32xbf16> to vector<32x32xbf16>
    %cst_13 = arith.constant dense<0.000000e+00> : vector<8x32xf32>
    %16 = tpu.matmul %13, %15, %cst_13 {dimension_numbers = #tpu.dot_dimension_numbers<[1], [0], [0], [1], [0, 0, 1, 1], [], []>} : vector<8x32xbf16>, vector<32x32xbf16>, vector<8x32xf32> -> vector<8x32xf32>
    %c1_14 = arith.constant 1 : index
    %c0_15 = arith.constant 0 : index
    %c0_16 = arith.constant 0 : index
    %17 = vector.load %arg5[%c1_14, %c0_15, %c0_16] : memref<3x1x32xf32, #tpu.memory_space<vmem>>, vector<1x1x32xf32>
    %18 = vector.shape_cast %17 : vector<1x1x32xf32> to vector<1x32xf32>
    %19 = vector.broadcast %18 : vector<1x32xf32> to vector<8x32xf32>
    %20 = arith.addf %16, %19 : vector<8x32xf32>
    %21 = vector.shape_cast %20 : vector<8x32xf32> to vector<1x8x32xf32>
    %c0_17 = arith.constant 0 : index
    %c0_18 = arith.constant 0 : index
    %c0_19 = arith.constant 0 : index
    %22 = vector.load %arg3[%c0_17, %c0_18, %c0_19] : memref<1x8x32xf32, #tpu.memory_space<vmem>>, vector<1x8x32xf32>
    %23 = vector.shape_cast %22 : vector<1x8x32xf32> to vector<8x32xf32>
    %24 = arith.truncf %23 : vector<8x32xf32> to vector<8x32xbf16>
    %c2 = arith.constant 2 : index
    %c0_20 = arith.constant 0 : index
    %c0_21 = arith.constant 0 : index
    %25 = vector.load %arg4[%c2, %c0_20, %c0_21] : memref<3x32x32xbf16, #tpu.memory_space<vmem>>, vector<1x32x32xbf16>
    %26 = vector.shape_cast %25 : vector<1x32x32xbf16> to vector<32x32xbf16>
    %cst_22 = arith.constant dense<0.000000e+00> : vector<8x32xf32>
    %27 = tpu.matmul %24, %26, %cst_22 {dimension_numbers = #tpu.dot_dimension_numbers<[1], [0], [0], [1], [0, 0, 1, 1], [], []>} : vector<8x32xbf16>, vector<32x32xbf16>, vector<8x32xf32> -> vector<8x32xf32>
    %c2_23 = arith.constant 2 : index
    %c0_24 = arith.constant 0 : index
    %c0_25 = arith.constant 0 : index
    %28 = vector.load %arg5[%c2_23, %c0_24, %c0_25] : memref<3x1x32xf32, #tpu.memory_space<vmem>>, vector<1x1x32xf32>
    %29 = vector.shape_cast %28 : vector<1x1x32xf32> to vector<1x32xf32>
    %30 = vector.broadcast %29 : vector<1x32xf32> to vector<8x32xf32>
    %31 = arith.addf %27, %30 : vector<8x32xf32>
    %32 = vector.shape_cast %31 : vector<8x32xf32> to vector<1x8x32xf32>
    %33 = vector.extract_strided_slice %10 {offsets = [0, 0, 0], sizes = [1, 8, 8], strides = [1, 1, 1]} : vector<1x8x32xf32> to vector<1x8x8xf32>
    %34 = vector.shape_cast %33 : vector<1x8x8xf32> to vector<8x8xf32>
    %35 = arith.truncf %34 : vector<8x8xf32> to vector<8x8xbf16>
    %36 = vector.extract_strided_slice %21 {offsets = [0, 0, 0], sizes = [1, 8, 8], strides = [1, 1, 1]} : vector<1x8x32xf32> to vector<1x8x8xf32>
    %37 = vector.shape_cast %36 : vector<1x8x8xf32> to vector<8x8xf32>
    %38 = arith.truncf %37 : vector<8x8xf32> to vector<8x8xbf16>
    %39 = vector.extract_strided_slice %32 {offsets = [0, 0, 0], sizes = [1, 8, 8], strides = [1, 1, 1]} : vector<1x8x32xf32> to vector<1x8x8xf32>
    %40 = vector.shape_cast %39 : vector<1x8x8xf32> to vector<8x8xf32>
    %cst_26 = arith.constant dense<0.000000e+00> : vector<8x8xf32>
    %41 = tpu.matmul %35, %38, %cst_26 {dimension_numbers = #tpu.dot_dimension_numbers<[1], [1], [0], [0], [0, 0, 1, 0], [], []>} : vector<8x8xbf16>, vector<8x8xbf16>, vector<8x8xf32> -> vector<8x8xf32>
    %cst_27 = arith.constant dense<0xFF800000> : vector<8xf32>
    %42 = vector.multi_reduction <maximumf>, %41, %cst_27 [1] : vector<8x8xf32> to vector<8xf32>
    %43 = vector.shape_cast %42 : vector<8xf32> to vector<8x1xf32>
    %44 = vector.broadcast %43 : vector<8x1xf32> to vector<8x8xf32>
    %45 = arith.subf %41, %44 : vector<8x8xf32>
    %46 = math.exp %45 : vector<8x8xf32>
    %cst_28 = arith.constant dense<0.000000e+00> : vector<8xf32>
    %47 = vector.multi_reduction <add>, %46, %cst_28 [1] : vector<8x8xf32> to vector<8xf32>
    %48 = vector.shape_cast %47 : vector<8xf32> to vector<8x1xf32>
    %49 = vector.broadcast %48 : vector<8x1xf32> to vector<8x8xf32>
    %50 = arith.divf %46, %49 : vector<8x8xf32>
    %51 = arith.truncf %50 : vector<8x8xf32> to vector<8x8xbf16>
    %52 = arith.truncf %40 : vector<8x8xf32> to vector<8x8xbf16>
    %cst_29 = arith.constant dense<0.000000e+00> : vector<8x8xf32>
    %53 = tpu.matmul %51, %52, %cst_29 {dimension_numbers = #tpu.dot_dimension_numbers<[1], [0], [0], [1], [0, 0, 1, 1], [], []>} : vector<8x8xbf16>, vector<8x8xbf16>, vector<8x8xf32> -> vector<8x8xf32>
    %c0_30 = arith.constant 0 : index
    %c0_31 = arith.constant 0 : index
    %54 = vector.load %arg7[%c0_30, %c0_31] : memref<8x32xf32, #tpu.memory_space<vmem>>, vector<8x8xf32>
    tpu.vector_store %arg7[%c0_30, %c0_31], %53 {strides = array<i32>} : memref<8x32xf32, #tpu.memory_space<vmem>>, vector<8x8xf32>,
    %55 = vector.extract_strided_slice %10 {offsets = [0, 0, 8], sizes = [1, 8, 8], strides = [1, 1, 1]} : vector<1x8x32xf32> to vector<1x8x8xf32>
    %56 = vector.shape_cast %55 : vector<1x8x8xf32> to vector<8x8xf32>
    %57 = arith.truncf %56 : vector<8x8xf32> to vector<8x8xbf16>
    %58 = vector.extract_strided_slice %21 {offsets = [0, 0, 8], sizes = [1, 8, 8], strides = [1, 1, 1]} : vector<1x8x32xf32> to vector<1x8x8xf32>
    %59 = vector.shape_cast %58 : vector<1x8x8xf32> to vector<8x8xf32>
    %60 = arith.truncf %59 : vector<8x8xf32> to vector<8x8xbf16>
    %61 = vector.extract_strided_slice %32 {offsets = [0, 0, 8], sizes = [1, 8, 8], strides = [1, 1, 1]} : vector<1x8x32xf32> to vector<1x8x8xf32>
    %62 = vector.shape_cast %61 : vector<1x8x8xf32> to vector<8x8xf32>
    %cst_32 = arith.constant dense<0.000000e+00> : vector<8x8xf32>
    %63 = tpu.matmul %57, %60, %cst_32 {dimension_numbers = #tpu.dot_dimension_numbers<[1], [1], [0], [0], [0, 0, 1, 0], [], []>} : vector<8x8xbf16>, vector<8x8xbf16>, vector<8x8xf32> -> vector<8x8xf32>
    %cst_33 = arith.constant dense<0xFF800000> : vector<8xf32>
    %64 = vector.multi_reduction <maximumf>, %63, %cst_33 [1] : vector<8x8xf32> to vector<8xf32>
    %65 = vector.shape_cast %64 : vector<8xf32> to vector<8x1xf32>
    %66 = vector.broadcast %65 : vector<8x1xf32> to vector<8x8xf32>
    %67 = arith.subf %63, %66 : vector<8x8xf32>
    %68 = math.exp %67 : vector<8x8xf32>
    %cst_34 = arith.constant dense<0.000000e+00> : vector<8xf32>
    %69 = vector.multi_reduction <add>, %68, %cst_34 [1] : vector<8x8xf32> to vector<8xf32>
    %70 = vector.shape_cast %69 : vector<8xf32> to vector<8x1xf32>
    %71 = vector.broadcast %70 : vector<8x1xf32> to vector<8x8xf32>
    %72 = arith.divf %68, %71 : vector<8x8xf32>
    %73 = arith.truncf %72 : vector<8x8xf32> to vector<8x8xbf16>
    %74 = arith.truncf %62 : vector<8x8xf32> to vector<8x8xbf16>
    %cst_35 = arith.constant dense<0.000000e+00> : vector<8x8xf32>
    %75 = tpu.matmul %73, %74, %cst_35 {dimension_numbers = #tpu.dot_dimension_numbers<[1], [0], [0], [1], [0, 0, 1, 1], [], []>} : vector<8x8xbf16>, vector<8x8xbf16>, vector<8x8xf32> -> vector<8x8xf32>
    %c0_36 = arith.constant 0 : index
    %c8 = arith.constant 8 : index
    %76 = vector.load %arg7[%c0_36, %c8] : memref<8x32xf32, #tpu.memory_space<vmem>>, vector<8x8xf32>
    tpu.vector_store %arg7[%c0_36, %c8], %75 {strides = array<i32>} : memref<8x32xf32, #tpu.memory_space<vmem>>, vector<8x8xf32>,
    %77 = vector.extract_strided_slice %10 {offsets = [0, 0, 16], sizes = [1, 8, 8], strides = [1, 1, 1]} : vector<1x8x32xf32> to vector<1x8x8xf32>
    %78 = vector.shape_cast %77 : vector<1x8x8xf32> to vector<8x8xf32>
    %79 = arith.truncf %78 : vector<8x8xf32> to vector<8x8xbf16>
    %80 = vector.extract_strided_slice %21 {offsets = [0, 0, 16], sizes = [1, 8, 8], strides = [1, 1, 1]} : vector<1x8x32xf32> to vector<1x8x8xf32>
    %81 = vector.shape_cast %80 : vector<1x8x8xf32> to vector<8x8xf32>
    %82 = arith.truncf %81 : vector<8x8xf32> to vector<8x8xbf16>
    %83 = vector.extract_strided_slice %32 {offsets = [0, 0, 16], sizes = [1, 8, 8], strides = [1, 1, 1]} : vector<1x8x32xf32> to vector<1x8x8xf32>
    %84 = vector.shape_cast %83 : vector<1x8x8xf32> to vector<8x8xf32>
    %cst_37 = arith.constant dense<0.000000e+00> : vector<8x8xf32>
    %85 = tpu.matmul %79, %82, %cst_37 {dimension_numbers = #tpu.dot_dimension_numbers<[1], [1], [0], [0], [0, 0, 1, 0], [], []>} : vector<8x8xbf16>, vector<8x8xbf16>, vector<8x8xf32> -> vector<8x8xf32>
    %cst_38 = arith.constant dense<0xFF800000> : vector<8xf32>
    %86 = vector.multi_reduction <maximumf>, %85, %cst_38 [1] : vector<8x8xf32> to vector<8xf32>
    %87 = vector.shape_cast %86 : vector<8xf32> to vector<8x1xf32>
    %88 = vector.broadcast %87 : vector<8x1xf32> to vector<8x8xf32>
    %89 = arith.subf %85, %88 : vector<8x8xf32>
    %90 = math.exp %89 : vector<8x8xf32>
    %cst_39 = arith.constant dense<0.000000e+00> : vector<8xf32>
    %91 = vector.multi_reduction <add>, %90, %cst_39 [1] : vector<8x8xf32> to vector<8xf32>
    %92 = vector.shape_cast %91 : vector<8xf32> to vector<8x1xf32>
    %93 = vector.broadcast %92 : vector<8x1xf32> to vector<8x8xf32>
    %94 = arith.divf %90, %93 : vector<8x8xf32>
    %95 = arith.truncf %94 : vector<8x8xf32> to vector<8x8xbf16>
    %96 = arith.truncf %84 : vector<8x8xf32> to vector<8x8xbf16>
    %cst_40 = arith.constant dense<0.000000e+00> : vector<8x8xf32>
    %97 = tpu.matmul %95, %96, %cst_40 {dimension_numbers = #tpu.dot_dimension_numbers<[1], [0], [0], [1], [0, 0, 1, 1], [], []>} : vector<8x8xbf16>, vector<8x8xbf16>, vector<8x8xf32> -> vector<8x8xf32>
    %c0_41 = arith.constant 0 : index
    %c16 = arith.constant 16 : index
    %98 = vector.load %arg7[%c0_41, %c16] : memref<8x32xf32, #tpu.memory_space<vmem>>, vector<8x8xf32>
    tpu.vector_store %arg7[%c0_41, %c16], %97 {strides = array<i32>} : memref<8x32xf32, #tpu.memory_space<vmem>>, vector<8x8xf32>,
    %99 = vector.extract_strided_slice %10 {offsets = [0, 0, 24], sizes = [1, 8, 8], strides = [1, 1, 1]} : vector<1x8x32xf32> to vector<1x8x8xf32>
    %100 = vector.shape_cast %99 : vector<1x8x8xf32> to vector<8x8xf32>
    %101 = arith.truncf %100 : vector<8x8xf32> to vector<8x8xbf16>
    %102 = vector.extract_strided_slice %21 {offsets = [0, 0, 24], sizes = [1, 8, 8], strides = [1, 1, 1]} : vector<1x8x32xf32> to vector<1x8x8xf32>
    %103 = vector.shape_cast %102 : vector<1x8x8xf32> to vector<8x8xf32>
    %104 = arith.truncf %103 : vector<8x8xf32> to vector<8x8xbf16>
    %105 = vector.extract_strided_slice %32 {offsets = [0, 0, 24], sizes = [1, 8, 8], strides = [1, 1, 1]} : vector<1x8x32xf32> to vector<1x8x8xf32>
    %106 = vector.shape_cast %105 : vector<1x8x8xf32> to vector<8x8xf32>
    %cst_42 = arith.constant dense<0.000000e+00> : vector<8x8xf32>
    %107 = tpu.matmul %101, %104, %cst_42 {dimension_numbers = #tpu.dot_dimension_numbers<[1], [1], [0], [0], [0, 0, 1, 0], [], []>} : vector<8x8xbf16>, vector<8x8xbf16>, vector<8x8xf32> -> vector<8x8xf32>
    %cst_43 = arith.constant dense<0xFF800000> : vector<8xf32>
    %108 = vector.multi_reduction <maximumf>, %107, %cst_43 [1] : vector<8x8xf32> to vector<8xf32>
    %109 = vector.shape_cast %108 : vector<8xf32> to vector<8x1xf32>
    %110 = vector.broadcast %109 : vector<8x1xf32> to vector<8x8xf32>
    %111 = arith.subf %107, %110 : vector<8x8xf32>
    %112 = math.exp %111 : vector<8x8xf32>
    %cst_44 = arith.constant dense<0.000000e+00> : vector<8xf32>
    %113 = vector.multi_reduction <add>, %112, %cst_44 [1] : vector<8x8xf32> to vector<8xf32>
    %114 = vector.shape_cast %113 : vector<8xf32> to vector<8x1xf32>
    %115 = vector.broadcast %114 : vector<8x1xf32> to vector<8x8xf32>
    %116 = arith.divf %112, %115 : vector<8x8xf32>
    %117 = arith.truncf %116 : vector<8x8xf32> to vector<8x8xbf16>
    %118 = arith.truncf %106 : vector<8x8xf32> to vector<8x8xbf16>
    %cst_45 = arith.constant dense<0.000000e+00> : vector<8x8xf32>
    %119 = tpu.matmul %117, %118, %cst_45 {dimension_numbers = #tpu.dot_dimension_numbers<[1], [0], [0], [1], [0, 0, 1, 1], [], []>} : vector<8x8xbf16>, vector<8x8xbf16>, vector<8x8xf32> -> vector<8x8xf32>
    %c0_46 = arith.constant 0 : index
    %c24 = arith.constant 24 : index
    %120 = vector.load %arg7[%c0_46, %c24] : memref<8x32xf32, #tpu.memory_space<vmem>>, vector<8x8xf32>
    tpu.vector_store %arg7[%c0_46, %c24], %119 {strides = array<i32>} : memref<8x32xf32, #tpu.memory_space<vmem>>, vector<8x8xf32>,
    %c0_47 = arith.constant 0 : index
    %c0_48 = arith.constant 0 : index
    %121 = vector.load %arg7[%c0_47, %c0_48] : memref<8x32xf32, #tpu.memory_space<vmem>>, vector<8x32xf32>
    %c0_49 = arith.constant 0 : index
    %c0_50 = arith.constant 0 : index
    %c0_51 = arith.constant 0 : index
    %122 = vector.load %arg6[%c0_49, %c0_50, %c0_51] : memref<1x8x32xf32, #tpu.memory_space<vmem>>, vector<1x8x32xf32>
    %123 = vector.shape_cast %122 : vector<1x8x32xf32> to vector<8x32xf32>
    %124 = vector.shape_cast %121 : vector<8x32xf32> to vector<1x8x32xf32>
    tpu.vector_store %arg6[%c0_49, %c0_50, %c0_51], %124 {strides = array<i32>} : memref<1x8x32xf32, #tpu.memory_space<vmem>>, vector<1x8x32xf32>,
    return
  }
  func.func @transform_0(%arg0: i32) -> (i32, i32, i32) {
    %c0_i32 = arith.constant 0 : i32
    %c0_i32_0 = arith.constant 0 : i32
    %c0_i32_1 = arith.constant 0 : i32
    return %arg0, %c0_i32, %c0_i32_0 : i32, i32, i32
  }
  func.func @transform_1(%arg0: i32) -> (i32, i32, i32) {
    %c0_i32 = arith.constant 0 : i32
    %c0_i32_0 = arith.constant 0 : i32
    %c0_i32_1 = arith.constant 0 : i32
    return %arg0, %c0_i32, %c0_i32_0 : i32, i32, i32
  }
  func.func @transform_2(%arg0: i32) -> (i32, i32, i32) {
    %c0_i32 = arith.constant 0 : i32
    %c0_i32_0 = arith.constant 0 : i32
    %c0_i32_1 = arith.constant 0 : i32
    return %arg0, %c0_i32, %c0_i32_0 : i32, i32, i32
  }
  func.func @transform_3(%arg0: i32) -> (i32, i32, i32) {
    %c0_i32 = arith.constant 0 : i32
    %c0_i32_0 = arith.constant 0 : i32
    %c0_i32_1 = arith.constant 0 : i32
    %c0_i32_2 = arith.constant 0 : i32
    return %c0_i32, %c0_i32_0, %c0_i32_1 : i32, i32, i32
  }
  func.func @transform_4(%arg0: i32) -> (i32, i32, i32) {
    %c0_i32 = arith.constant 0 : i32
    %c0_i32_0 = arith.constant 0 : i32
    %c0_i32_1 = arith.constant 0 : i32
    %c0_i32_2 = arith.constant 0 : i32
    return %c0_i32, %c0_i32_0, %c0_i32_1 : i32, i32, i32
  }
  func.func @transform_5(%arg0: i32) -> (i32, i32, i32) {
    %c0_i32 = arith.constant 0 : i32
    %c0_i32_0 = arith.constant 0 : i32
    %c0_i32_1 = arith.constant 0 : i32
    return %arg0, %c0_i32, %c0_i32_0 : i32, i32, i32
  }
}

</mosaic_0001>

<llo_original>
// kernel: tpu_custom_call.1
$region0: #{tpu_custom_call.1}
  #allocation0 [shape = 'u32[]', space=smem, size = 0x4, offset = 0x4, fixed_abs, tag = 'smem constant byte address 0x4 - core index']
  #allocation1 [shape = 'u32[144,128]{1,0:T(1,128)}', space=vmem, size = 0x12000, scoped, tag = 'internal scratch']
  #allocation2 [shape = 'f32[8,32]{1,0:T(8,128)}', space=vmem, size = 0x1000, scoped, tag = 'scratch operand']
  %s0 = inlined_call_operand.hbm [shape: f32[2,8,32], index: 0, kind: input, shape index: {}]
  %s1 = inlined_call_operand.hbm [shape: f32[2,8,32], index: 1, kind: input, shape index: {}]
  %s2 = inlined_call_operand.hbm [shape: f32[2,8,32], index: 2, kind: input, shape index: {}]
  %s3 = inlined_call_operand.hbm [shape: bf16[3,32,32], index: 3, kind: input, shape index: {}]
  %s4 = inlined_call_operand.vmem [shape: f32[3,1,32], index: 4, kind: input, shape index: {}]
  %s5 = inlined_call_operand.hbm [shape: f32[2,8,32], index: 5, kind: output, shape index: {}]
  %s6 = sld [smem:[#allocation0]]
  $region69: #{tpu_custom_call.1} parent=0
    _
  %s8 = ssub.s32 1, %s6
  %s9 = scalar_select 0, %s8, %s6
  $region1: #{tpu_custom_call.1} parent=0
    #allocation3 [shape = 'u8[8192]{0}', space=vmem, size = 0x2000, scoped, tag = 'input window, operand 0']
    #allocation4 [shape = 's32[2]{0}', space=sflag, size = 0x8, scoped, tag = 'scoped memory for tpu_custom_call.1']
    #allocation5 [shape = 's32[2]{0}', space=sflag, size = 0x8, scoped, tag = 'scoped memory for tpu_custom_call.1']
    #allocation6 [shape = 'u8[8192]{0}', space=vmem, size = 0x2000, scoped, tag = 'input window, operand 1']
    #allocation7 [shape = 's32[2]{0}', space=sflag, size = 0x8, scoped, tag = 'scoped memory for tpu_custom_call.1']
    #allocation8 [shape = 'u8[8192]{0}', space=vmem, size = 0x2000, scoped, tag = 'input window, operand 2']
    #allocation9 [shape = 'u8[24576]{0}', space=vmem, size = 0x6000, scoped, tag = 'input window, operand 3, single buffered']
    #allocation10 [shape = 's32[1]{0}', space=sflag, size = 0x4, scoped, tag = 'scoped memory for tpu_custom_call.1']
    #allocation11 [shape = 'u8[8192]{0}', space=vmem, size = 0x2000, scoped, tag = 'output window, operand 0']
    %10 = vsyncpa [#allocation4], 0
    %s11 = scalar_lea.sflag [#allocation4], 1
    %12 = vsyncpa %s11, 0
    %13 = vsyncpa [#allocation7], 0
    %s14 = scalar_lea.sflag [#allocation7], 1
    %15 = vsyncpa %s14, 0
    %16 = vsyncpa [#allocation10], 0
    %17 = vsyncpa [#allocation5], 0
    %s18 = scalar_lea.sflag [#allocation5], 1
    %19 = vsyncpa %s18, 0
    loop: start=0, step=1, limit=4
    $region2: #{tpu_custom_call.1} parent=1 // loop_pre_header
      _
    $region3: #{tpu_custom_call.1} parent=1 // loop_header
      %s21 = sphi 0, %s25
      %p22 = scmp.ge.s32.totalorder %s21, 4
      %s31 = sphi 0, %s33
      %s34 = sphi 0, %s31
      %s35 = sphi 0, %s34
      %s51 = sphi 0, %s35
      %s57 = sphi 0, %s59
      %s60 = sphi 0, %s57
      %s61 = sphi 0, %s60
      %s77 = sphi 0, %s61
      %s83 = sphi 0, %s85
      %s86 = sphi 0, %s83
      %s87 = sphi 0, %s86
      %s103 = sphi 0, %s87
      %s107 = sphi 0, %s107
      %s109 = sphi 0, %s107
      %s110 = sphi 0, %s109
      %s124 = sphi 0, %s110
      %s128 = sphi 0, %s128
      %s130 = sphi 0, %s128
      %s131 = sphi 0, %s130
      %s145 = sphi 0, %s131
      %s151 = sphi 0, %s153
      %s154 = sphi 0, %s151
      %s155 = sphi 0, %s154
      %s171 = sphi 0, %s155
    $region4: #{tpu_custom_call.1} parent=1 // loop_header_branch
      %24 = sbr.rel (%p22) target = $region8
    $region5: #{tpu_custom_call.1} parent=1 // loop_body
      %s26 = ssub.s32 %s21, 1
      %s27 = ssub.s32 %s21, 2
      %s28 = sadd.s32 %s21, 1
      %s29 = ssub.s32 %s21, %s28
      %p30 = scmp.eq.s32.totalorder %s29, 0
      %s32 = sadd.s32 %s31, 1
      %s33 = scalar_select %p30, %s31, %s32
      %p36 = pneg %p30
      %p37 = scmp.eq.s32.totalorder %s21, 1
      %p38 = por %p36, %p37
      %p39 = scmp.ne.s32.totalorder %s31, %s34
      %p40 = scmp.eq.s32.totalorder %s21, 0
      %p41 = por %p39, %p40
      %p42 = scmp.ne.s32.totalorder %s31, %s34
      %p43 = scmp.eq.s32.totalorder %s26, 1
      %p44 = por %p42, %p43
      %p45 = scmp.ne.s32.totalorder %s34, %s35
      %p46 = scmp.eq.s32.totalorder %s26, 0
      %p47 = por %p45, %p46
      %p48 = scmp.ne.s32.totalorder %s34, %s35
      %p49 = scmp.eq.s32.totalorder %s27, 1
      %p50 = por %p48, %p49
      %p52 = scmp.ne.s32.totalorder %s35, %s51
      %p53 = scmp.eq.s32.totalorder %s27, 0
      %p54 = por %p52, %p53
      %s55 = ssub.s32 %s21, %s28
      %p56 = scmp.eq.s32.totalorder %s55, 0
      %s58 = sadd.s32 %s57, 1
      %s59 = scalar_select %p56, %s57, %s58
      %p62 = pneg %p56
      %p63 = scmp.eq.s32.totalorder %s21, 1
      %p64 = por %p62, %p63
      %p65 = scmp.ne.s32.totalorder %s57, %s60
      %p66 = scmp.eq.s32.totalorder %s21, 0
      %p67 = por %p65, %p66
      %p68 = scmp.ne.s32.totalorder %s57, %s60
      %p69 = scmp.eq.s32.totalorder %s26, 1
      %p70 = por %p68, %p69
      %p71 = scmp.ne.s32.totalorder %s60, %s61
      %p72 = scmp.eq.s32.totalorder %s26, 0
      %p73 = por %p71, %p72
      %p74 = scmp.ne.s32.totalorder %s60, %s61
      %p75 = scmp.eq.s32.totalorder %s27, 1
      %p76 = por %p74, %p75
      %p78 = scmp.ne.s32.totalorder %s61, %s77
      %p79 = scmp.eq.s32.totalorder %s27, 0
      %p80 = por %p78, %p79
      %s81 = ssub.s32 %s21, %s28
      %p82 = scmp.eq.s32.totalorder %s81, 0
      %s84 = sadd.s32 %s83, 1
      %s85 = scalar_select %p82, %s83, %s84
      %p88 = pneg %p82
      %p89 = scmp.eq.s32.totalorder %s21, 1
      %p90 = por %p88, %p89
      %p91 = scmp.ne.s32.totalorder %s83, %s86
      %p92 = scmp.eq.s32.totalorder %s21, 0
      %p93 = por %p91, %p92
      %p94 = scmp.ne.s32.totalorder %s83, %s86
      %p95 = scmp.eq.s32.totalorder %s26, 1
      %p96 = por %p94, %p95
      %p97 = scmp.ne.s32.totalorder %s86, %s87
      %p98 = scmp.eq.s32.totalorder %s26, 0
      %p99 = por %p97, %p98
      %p100 = scmp.ne.s32.totalorder %s86, %s87
      %p101 = scmp.eq.s32.totalorder %s27, 1
      %p102 = por %p100, %p101
      %p104 = scmp.ne.s32.totalorder %s87, %s103
      %p105 = scmp.eq.s32.totalorder %s27, 0
      %p106 = por %p104, %p105
      %s108 = sadd.s32 %s107, 1
      %p111 = scmp.eq.s32.totalorder %s21, 1
      %p112 = scmp.ne.s32.totalorder %s107, %s109
      %p113 = scmp.eq.s32.totalorder %s21, 0
      %p114 = por %p112, %p113
      %p115 = scmp.ne.s32.totalorder %s107, %s109
      %p116 = scmp.eq.s32.totalorder %s26, 1
      %p117 = por %p115, %p116
      %p118 = scmp.ne.s32.totalorder %s109, %s110
      %p119 = scmp.eq.s32.totalorder %s26, 0
      %p120 = por %p118, %p119
      %p121 = scmp.ne.s32.totalorder %s109, %s110
      %p122 = scmp.eq.s32.totalorder %s27, 1
      %p123 = por %p121, %p122
      %p125 = scmp.ne.s32.totalorder %s110, %s124
      %p126 = scmp.eq.s32.totalorder %s27, 0
      %p127 = por %p125, %p126
      %s129 = sadd.s32 %s128, 1
      %p132 = scmp.eq.s32.totalorder %s21, 1
      %p133 = scmp.ne.s32.totalorder %s128, %s130
      %p134 = scmp.eq.s32.totalorder %s21, 0
      %p135 = por %p133, %p134
      %p136 = scmp.ne.s32.totalorder %s128, %s130
      %p137 = scmp.eq.s32.totalorder %s26, 1
      %p138 = por %p136, %p137
      %p139 = scmp.ne.s32.totalorder %s130, %s131
      %p140 = scmp.eq.s32.totalorder %s26, 0
      %p141 = por %p139, %p140
      %p142 = scmp.ne.s32.totalorder %s130, %s131
      %p143 = scmp.eq.s32.totalorder %s27, 1
      %p144 = por %p142, %p143
      %p146 = scmp.ne.s32.totalorder %s131, %s145
      %p147 = scmp.eq.s32.totalorder %s27, 0
      %p148 = por %p146, %p147
      %s149 = ssub.s32 %s21, %s28
      %p150 = scmp.eq.s32.totalorder %s149, 0
      %s152 = sadd.s32 %s151, 1
      %s153 = scalar_select %p150, %s151, %s152
      %p156 = pneg %p150
      %p157 = scmp.eq.s32.totalorder %s21, 1
      %p158 = por %p156, %p157
      %p159 = scmp.ne.s32.totalorder %s151, %s154
      %p160 = scmp.eq.s32.totalorder %s21, 0
      %p161 = por %p159, %p160
      %p162 = scmp.ne.s32.totalorder %s151, %s154
      %p163 = scmp.eq.s32.totalorder %s26, 1
      %p164 = por %p162, %p163
      %p165 = scmp.ne.s32.totalorder %s154, %s155
      %p166 = scmp.eq.s32.totalorder %s26, 0
      %p167 = por %p165, %p166
      %p168 = scmp.ne.s32.totalorder %s154, %s155
      %p169 = scmp.eq.s32.totalorder %s27, 1
      %p170 = por %p168, %p169
      %p172 = scmp.ne.s32.totalorder %s155, %s171
      %p173 = scmp.eq.s32.totalorder %s27, 0
      %p174 = por %p172, %p173
      %p175 = scmp.le.s32.totalorder 1, %s21
      %p176 = scmp.lt.s32.totalorder %s21, 3
      %p177 = pnand %p175, %p176
      %p178 = pneg %p177
      // Predicated region
      $region9: #{tpu_custom_call.1} parent=5 // pred_check
        _
      $region10: #{tpu_custom_call.1} parent=5 // pred_check_branch
        %180 = sbr.rel (%p177) target = $region12
      $region11: #{tpu_custom_call.1} parent=5 // pred_region
        %s181 = ssub.s32 %s21, 1
        // Predicated region
        $region13: #{tpu_custom_call.1} parent=11 // pred_check
          %p182 = pneg %p120
        $region14: #{tpu_custom_call.1} parent=11 // pred_check_branch
          %184 = sbr.rel (%p182) target = $region16
        $region15: #{tpu_custom_call.1} parent=11 // pred_region
          %s186 = ssub.s32 768, 768
          %187 = vsyncadd [#allocation10], %s186
          %s188 = sshll.u32 [#allocation9], 4
          %s189 = int_to_ptr.vmem [resolvable:$true] %s188
          %194 = dma.hbm_to_vmem [thread:$0]  %s3, 768, %s189, [#allocation10], 64, 64, 4
        $region16: #{tpu_custom_call.1} parent=11 // pred_fallthru
          _
        // Predicated region
        $region17: #{tpu_custom_call.1} parent=11 // pred_check
          %p195 = pneg %p141
        $region18: #{tpu_custom_call.1} parent=11 // pred_check_branch
          %197 = sbr.rel (%p195) target = $region20
        $region19: #{tpu_custom_call.1} parent=11 // pred_region
          _
        $region20: #{tpu_custom_call.1} parent=11 // pred_fallthru
          _
      $region12: #{tpu_custom_call.1} parent=5 // pred_fallthru
        _
      %p198 = scmp.lt.s32.totalorder %s21, 2
      // Predicated region
      $region21: #{tpu_custom_call.1} parent=5 // pred_check
        %p199 = pneg %p198
      $region22: #{tpu_custom_call.1} parent=5 // pred_check_branch
        %201 = sbr.rel (%p199) target = $region24
      $region23: #{tpu_custom_call.1} parent=5 // pred_region
        // Predicated region
        $region25: #{tpu_custom_call.1} parent=23 // pred_check
          %p202 = pneg %p41
        $region26: #{tpu_custom_call.1} parent=23 // pred_check_branch
          %204 = sbr.rel (%p202) target = $region28
        $region27: #{tpu_custom_call.1} parent=23 // pred_region
          %s205 = sand.u32 %s31, 1
          %s206 = scalar_lea.sflag [#allocation4], %s205
          %s207 = sand.u32 %s31, 1
          %s208 = smul.addr %s207, 8
          %s209 = scalar_lea.vmem [#allocation3], %s208
          %s211 = ssub.s32 128, 128
          %212 = vsyncadd %s206, %s211
          %s213 = smul.addr %s21, 128
          %s214 = scalar_lea.hbm %s0, %s213
          %s216 = sshll.u32 %s209, 4
          %s217 = int_to_ptr.vmem [resolvable:$true] %s216
          %219 = dma.hbm_to_vmem [thread:$0]  %s214, 128, %s217, %s206
        $region28: #{tpu_custom_call.1} parent=23 // pred_fallthru
          _
        // Predicated region
        $region29: #{tpu_custom_call.1} parent=23 // pred_check
          %p220 = pneg %p67
        $region30: #{tpu_custom_call.1} parent=23 // pred_check_branch
          %222 = sbr.rel (%p220) target = $region32
        $region31: #{tpu_custom_call.1} parent=23 // pred_region
          %s223 = sand.u32 %s21, 1
          %s224 = scalar_lea.sflag [#allocation7], %s223
          %s225 = sand.u32 %s57, 1
          %s226 = smul.addr %s225, 8
          %s227 = scalar_lea.vmem [#allocation6], %s226
          %s229 = ssub.s32 128, 128
          %230 = vsyncadd %s224, %s229
          %s231 = smul.addr %s21, 128
          %s232 = scalar_lea.hbm %s1, %s231
          %s234 = sshll.u32 %s227, 4
          %s235 = int_to_ptr.vmem [resolvable:$true] %s234
          %237 = dma.hbm_to_vmem [thread:$0]  %s232, 128, %s235, %s224
        $region32: #{tpu_custom_call.1} parent=23 // pred_fallthru
          _
        // Predicated region
        $region33: #{tpu_custom_call.1} parent=23 // pred_check
          %p238 = pneg %p93
        $region34: #{tpu_custom_call.1} parent=23 // pred_check_branch
          %240 = sbr.rel (%p238) target = $region36
        $region35: #{tpu_custom_call.1} parent=23 // pred_region
          %s241 = sand.u32 %s21, 1
          %s242 = scalar_lea.sflag [#allocation7], %s241
          %s243 = sand.u32 %s83, 1
          %s244 = smul.addr %s243, 8
          %s245 = scalar_lea.vmem [#allocation8], %s244
          %s247 = ssub.s32 128, 128
          %248 = vsyncadd %s242, %s247
          %s249 = smul.addr %s21, 128
          %s250 = scalar_lea.hbm %s2, %s249
          %s252 = sshll.u32 %s245, 4
          %s253 = int_to_ptr.vmem [resolvable:$true] %s252
          %255 = dma.hbm_to_vmem [thread:$0]  %s250, 128, %s253, %s242
        $region36: #{tpu_custom_call.1} parent=23 // pred_fallthru
          _
      $region24: #{tpu_custom_call.1} parent=5 // pred_fallthru
        _
      %p256 = scmp.le.s32.totalorder 1, %s21
      %p257 = scmp.lt.s32.totalorder %s21, 3
      %p258 = pnand %p256, %p257
      %p259 = pneg %p258
      // Predicated region
      $region37: #{tpu_custom_call.1} parent=5 // pred_check
        _
      $region38: #{tpu_custom_call.1} parent=5 // pred_check_branch
        %261 = sbr.rel (%p258) target = $region40
      $region39: #{tpu_custom_call.1} parent=5 // pred_region
        %s262 = ssub.s32 %s21, 1
        %s263 = sand.u32 %s34, 1
        %s264 = scalar_lea.sflag [#allocation4], %s263
        %s265 = sand.u32 %s34, 1
        %s266 = smul.addr %s265, 8
        %s267 = scalar_lea.vmem [#allocation3], %s266
        // Predicated region
        $region41: #{tpu_custom_call.1} parent=39 // pred_check
          %p268 = pneg %p47
        $region42: #{tpu_custom_call.1} parent=39 // pred_check_branch
          %270 = sbr.rel (%p268) target = $region44
        $region43: #{tpu_custom_call.1} parent=39 // pred_region
          %271 = dma.done %s264, 128
        $region44: #{tpu_custom_call.1} parent=39 // pred_fallthru
          _
        %s272 = sand.u32 %s26, 1
        %s273 = scalar_lea.sflag [#allocation7], %s272
        %s274 = sand.u32 %s60, 1
        %s275 = smul.addr %s274, 8
        %s276 = scalar_lea.vmem [#allocation6], %s275
        // Predicated region
        $region45: #{tpu_custom_call.1} parent=39 // pred_check
          %p277 = pneg %p73
        $region46: #{tpu_custom_call.1} parent=39 // pred_check_branch
          %279 = sbr.rel (%p277) target = $region48
        $region47: #{tpu_custom_call.1} parent=39 // pred_region
          %280 = dma.done %s273, 128
        $region48: #{tpu_custom_call.1} parent=39 // pred_fallthru
          _
        %s281 = sand.u32 %s26, 1
        %s282 = scalar_lea.sflag [#allocation7], %s281
        %s283 = sand.u32 %s86, 1
        %s284 = smul.addr %s283, 8
        %s285 = scalar_lea.vmem [#allocation8], %s284
        // Predicated region
        $region49: #{tpu_custom_call.1} parent=39 // pred_check
          %p286 = pneg %p99
        $region50: #{tpu_custom_call.1} parent=39 // pred_check_branch
          %288 = sbr.rel (%p286) target = $region52
        $region51: #{tpu_custom_call.1} parent=39 // pred_region
          %289 = dma.done %s282, 128
        $region52: #{tpu_custom_call.1} parent=39 // pred_fallthru
          _
        // Predicated region
        $region53: #{tpu_custom_call.1} parent=39 // pred_check
          %p290 = pneg %p120
        $region54: #{tpu_custom_call.1} parent=39 // pred_check_branch
          %292 = sbr.rel (%p290) target = $region56
        $region55: #{tpu_custom_call.1} parent=39 // pred_region
          %293 = dma.done [#allocation10], 768
        $region56: #{tpu_custom_call.1} parent=39 // pred_fallthru
          _
        %s294 = sand.u32 %s34, 1
        %s295 = scalar_lea.sflag [#allocation4], %s294
        %s296 = sand.u32 %s34, 1
        %s297 = smul.addr %s296, 8
        %s298 = scalar_lea.vmem [#allocation3], %s297
        %p299 = pneg %p47
        %p300 = pneg %p44
        %s301 = sand.u32 %s26, 1
        %s302 = scalar_lea.sflag [#allocation7], %s301
        %s303 = sand.u32 %s60, 1
        %s304 = smul.addr %s303, 8
        %s305 = scalar_lea.vmem [#allocation6], %s304
        %p306 = pneg %p73
        %p307 = pneg %p70
        %s308 = sand.u32 %s26, 1
        %s309 = scalar_lea.sflag [#allocation7], %s308
        %s310 = sand.u32 %s86, 1
        %s311 = smul.addr %s310, 8
        %s312 = scalar_lea.vmem [#allocation8], %s311
        %p313 = pneg %p99
        %p314 = pneg %p96
        %p315 = pneg %p120
        %p316 = pneg %p117
        %p317 = pneg %p141
        %p318 = pneg %p138
        %p319 = pneg %p167
        %p320 = pneg %p164
        %s321 = sand.u32 %s154, 1
        %s322 = scalar_lea.sflag [#allocation5], %s321
        %s323 = sand.u32 %s154, 1
        %s324 = smul.addr %s323, 8
        %s325 = scalar_lea.vmem [#allocation11], %s324
        %v327 = vld [vmem:[%s267] sm:$0xff]
        %v328 = vpack.c.bf16 %v327, %v327
        %v329 = vld [vmem:[#allocation9] sm:$0xf]
        %v330 = vld [vmem:[#allocation9 + $0x4] sm:$0xf]
        %v331 = vld [vmem:[#allocation9 + $0x8] sm:$0xf]
        %v332 = vld [vmem:[#allocation9 + $0xc] sm:$0xf]
        %v333 = vld [vmem:[%s4] sm:$0x1]
        %v335 = vlaneseq
        %v336 = vshrl.u32 %v335, 7
        %v337 = vsub.s32 0, %v336
        %v338 = vrot.slane %v333, %v337
        %v344 = vunpack.c.l.b16 %v329
        %v345 = vunpack.c.l.b16 %v330
        %v346 = vunpack.c.l.b16 %v331
        %v347 = vunpack.c.l.b16 %v332
        %v348 = vpack.c.b16 %v345, %v344
        %v349 = vpack.c.b16 %v347, %v346
        %vm352 = vcmask 261120
        %v354 = vsel %vm352, %v328, 0
        %356 = vmatprep.subr.bf16.mxu0 0
        %357 = vmatpush1.bf16.msra.mxu0 %v348
        %358 = vmatprep.subr.bf16.mxu0 0
        %359 = vmatpush1.bf16.msra.mxu0 %v349
        %360 = vmatprep.subr.bf16.mxu0 0
        %361 = vmatpush1.bf16.msra.mxu0 0
        %362 = vmatprep.subr.bf16.mxu0 0
        %363 = vmatpush1.bf16.msra.mxu0 0
        %364 = vmatprep.subr.bf16.mxu0 0
        %365 = vmatpush1.bf16.msra.mxu0 0
        %366 = vmatprep.subr.bf16.mxu0 0
        %367 = vmatpush1.bf16.msra.mxu0 0
        %368 = vmatprep.subr.bf16.mxu0 0
        %369 = vmatpush1.bf16.msra.mxu0 0
        %370 = vmatprep.subr.bf16.mxu0 0
        %371 = vmatpush1.bf16.msra.mxu0 0
        %372 = vmatprep.subr.bf16.mxu0 0
        %373 = vmatpush1.bf16.msra.mxu0 0
        %374 = vmatprep.subr.bf16.mxu0 0
        %375 = vmatpush1.bf16.msra.mxu0 0
        %376 = vmatprep.subr.bf16.mxu0 0
        %377 = vmatpush1.bf16.msra.mxu0 0
        %378 = vmatprep.subr.bf16.mxu0 0
        %379 = vmatpush1.bf16.msra.mxu0 0
        %380 = vmatprep.subr.bf16.mxu0 0
        %381 = vmatpush1.bf16.msra.mxu0 0
        %382 = vmatprep.subr.bf16.mxu0 0
        %383 = vmatpush1.bf16.msra.mxu0 0
        %384 = vmatprep.subr.bf16.mxu0 0
        %385 = vmatpush1.bf16.msra.mxu0 0
        %386 = vmatprep.subr.bf16.mxu0 0
        %387 = vmatpush1.bf16.msra.mxu0 0
        %388 = vmatprep.mubr.bf16.mxu0 0
        %389 = vmatmul.mubr.bf16.gmra.mrb[0].mxu0 %v354
        %v390 = vpop.f32.mrb[0].mxu0
        %v391 = vadd.f32 %v338, %v390
        %v392 = vpop.f32.mrb[0].mxu0
        %v393 = vpop.f32.mrb[0].mxu0
        %v394 = vpop.f32.mrb[0].mxu0
        %395 = vdwg.mxu0
        %v396 = vld [vmem:[%s276] sm:$0xff]
        %v397 = vpack.c.bf16 %v396, %v396
        %s398 = scalar_lea.vmem [#allocation9], 16
        %v399 = vld [vmem:[%s398] sm:$0xf]
        %v400 = vld [vmem:[%s398 + $0x4] sm:$0xf]
        %v401 = vld [vmem:[%s398 + $0x8] sm:$0xf]
        %v402 = vld [vmem:[%s398 + $0xc] sm:$0xf]
        %s403 = scalar_lea.vmem %s4, 1
        %v404 = vld [vmem:[%s403] sm:$0x1]
        %v406 = vlaneseq
        %v407 = vshrl.u32 %v406, 7
        %v408 = vsub.s32 0, %v407
        %v409 = vrot.slane %v404, %v408
        %v415 = vunpack.c.l.b16 %v399
        %v416 = vunpack.c.l.b16 %v400
        %v417 = vunpack.c.l.b16 %v401
        %v418 = vunpack.c.l.b16 %v402
        %v419 = vpack.c.b16 %v416, %v415
        %v420 = vpack.c.b16 %v418, %v417
        %v424 = vsel %vm352, %v397, 0
        %426 = vmatprep.subr.bf16.mxu0 0
        %427 = vmatpush1.bf16.msra.mxu0 %v419
        %428 = vmatprep.subr.bf16.mxu0 0
        %429 = vmatpush1.bf16.msra.mxu0 %v420
        %430 = vmatprep.subr.bf16.mxu0 0
        %431 = vmatpush1.bf16.msra.mxu0 0
        %432 = vmatprep.subr.bf16.mxu0 0
        %433 = vmatpush1.bf16.msra.mxu0 0
        %434 = vmatprep.subr.bf16.mxu0 0
        %435 = vmatpush1.bf16.msra.mxu0 0
        %436 = vmatprep.subr.bf16.mxu0 0
        %437 = vmatpush1.bf16.msra.mxu0 0
        %438 = vmatprep.subr.bf16.mxu0 0
        %439 = vmatpush1.bf16.msra.mxu0 0
        %440 = vmatprep.subr.bf16.mxu0 0
        %441 = vmatpush1.bf16.msra.mxu0 0
        %442 = vmatprep.subr.bf16.mxu0 0
        %443 = vmatpush1.bf16.msra.mxu0 0
        %444 = vmatprep.subr.bf16.mxu0 0
        %445 = vmatpush1.bf16.msra.mxu0 0
        %446 = vmatprep.subr.bf16.mxu0 0
        %447 = vmatpush1.bf16.msra.mxu0 0
        %448 = vmatprep.subr.bf16.mxu0 0
        %449 = vmatpush1.bf16.msra.mxu0 0
        %450 = vmatprep.subr.bf16.mxu0 0
        %451 = vmatpush1.bf16.msra.mxu0 0
        %452 = vmatprep.subr.bf16.mxu0 0
        %453 = vmatpush1.bf16.msra.mxu0 0
        %454 = vmatprep.subr.bf16.mxu0 0
        %455 = vmatpush1.bf16.msra.mxu0 0
        %456 = vmatprep.subr.bf16.mxu0 0
        %457 = vmatpush1.bf16.msra.mxu0 0
        %458 = vmatprep.mubr.bf16.mxu0 0
        %459 = vmatmul.mubr.bf16.gmra.mrb[0].mxu0 %v424
        %v460 = vpop.f32.mrb[0].mxu0
        %v461 = vadd.f32 %v409, %v460
        %v462 = vpop.f32.mrb[0].mxu0
        %v463 = vpop.f32.mrb[0].mxu0
        %v464 = vpop.f32.mrb[0].mxu0
        %465 = vdwg.mxu0
        %v466 = vld [vmem:[%s285] sm:$0xff]
        %v467 = vpack.c.bf16 %v466, %v466
        %s468 = scalar_lea.vmem [#allocation9], 32
        %v469 = vld [vmem:[%s468] sm:$0xf]
        %v470 = vld [vmem:[%s468 + $0x4] sm:$0xf]
        %v471 = vld [vmem:[%s468 + $0x8] sm:$0xf]
        %v472 = vld [vmem:[%s468 + $0xc] sm:$0xf]
        %s473 = scalar_lea.vmem %s4, 2
        %v474 = vld [vmem:[%s473] sm:$0x1]
        %v476 = vlaneseq
        %v477 = vshrl.u32 %v476, 7
        %v478 = vsub.s32 0, %v477
        %v479 = vrot.slane %v474, %v478
        %v485 = vunpack.c.l.b16 %v469
        %v486 = vunpack.c.l.b16 %v470
        %v487 = vunpack.c.l.b16 %v471
        %v488 = vunpack.c.l.b16 %v472
        %v489 = vpack.c.b16 %v486, %v485
        %v490 = vpack.c.b16 %v488, %v487
        %v494 = vsel %vm352, %v467, 0
        %496 = vmatprep.subr.bf16.mxu0 0
        %497 = vmatpush1.bf16.msra.mxu0 %v489
        %498 = vmatprep.subr.bf16.mxu0 0
        %499 = vmatpush1.bf16.msra.mxu0 %v490
        %500 = vmatprep.subr.bf16.mxu0 0
        %501 = vmatpush1.bf16.msra.mxu0 0
        %502 = vmatprep.subr.bf16.mxu0 0
        %503 = vmatpush1.bf16.msra.mxu0 0
        %504 = vmatprep.subr.bf16.mxu0 0
        %505 = vmatpush1.bf16.msra.mxu0 0
        %506 = vmatprep.subr.bf16.mxu0 0
        %507 = vmatpush1.bf16.msra.mxu0 0
        %508 = vmatprep.subr.bf16.mxu0 0
        %509 = vmatpush1.bf16.msra.mxu0 0
        %510 = vmatprep.subr.bf16.mxu0 0
        %511 = vmatpush1.bf16.msra.mxu0 0
        %512 = vmatprep.subr.bf16.mxu0 0
        %513 = vmatpush1.bf16.msra.mxu0 0
        %514 = vmatprep.subr.bf16.mxu0 0
        %515 = vmatpush1.bf16.msra.mxu0 0
        %516 = vmatprep.subr.bf16.mxu0 0
        %517 = vmatpush1.bf16.msra.mxu0 0
        %518 = vmatprep.subr.bf16.mxu0 0
        %519 = vmatpush1.bf16.msra.mxu0 0
        %520 = vmatprep.subr.bf16.mxu0 0
        %521 = vmatpush1.bf16.msra.mxu0 0
        %522 = vmatprep.subr.bf16.mxu0 0
        %523 = vmatpush1.bf16.msra.mxu0 0
        %524 = vmatprep.subr.bf16.mxu0 0
        %525 = vmatpush1.bf16.msra.mxu0 0
        %526 = vmatprep.subr.bf16.mxu0 0
        %527 = vmatpush1.bf16.msra.mxu0 0
        %528 = vmatprep.mubr.bf16.mxu0 0
        %529 = vmatmul.mubr.bf16.gmra.mrb[0].mxu0 %v494
        %v530 = vpop.f32.mrb[0].mxu0
        %v531 = vadd.f32 %v479, %v530
        %v532 = vpop.f32.mrb[0].mxu0
        %v533 = vpop.f32.mrb[0].mxu0
        %v534 = vpop.f32.mrb[0].mxu0
        %535 = vdwg.mxu0
        %v536 = vpack.c.bf16 %v391, %v391
        %v537 = vpack.c.bf16 %v461, %v461
        %vm538 = vcmask 64512
        %v540 = vsel %vm538, %v536, 0
        %v543 = vsel %vm538, %v537, 0
        %545 = vmatprep.subr.bf16.mxu0 0
        %546 = vmatpush1.bf16.xpose.msra.mxu0 %v543
        %547 = vmatprep.subr.bf16.mxu0 0
        %548 = vmatpush1.bf16.xpose.msra.mxu0 0
        %549 = vmatprep.subr.bf16.mxu0 0
        %550 = vmatpush1.bf16.xpose.msra.mxu0 0
        %551 = vmatprep.subr.bf16.mxu0 0
        %552 = vmatpush1.bf16.xpose.msra.mxu0 0
        %553 = vmatprep.subr.bf16.mxu0 0
        %554 = vmatpush1.bf16.xpose.msra.mxu0 0
        %555 = vmatprep.subr.bf16.mxu0 0
        %556 = vmatpush1.bf16.xpose.msra.mxu0 0
        %557 = vmatprep.subr.bf16.mxu0 0
        %558 = vmatpush1.bf16.xpose.msra.mxu0 0
        %559 = vmatprep.subr.bf16.mxu0 0
        %560 = vmatpush1.bf16.xpose.msra.mxu0 0
        %561 = vmatprep.subr.bf16.mxu0 0
        %562 = vmatpush1.bf16.xpose.msra.mxu0 0
        %563 = vmatprep.subr.bf16.mxu0 0
        %564 = vmatpush1.bf16.xpose.msra.mxu0 0
        %565 = vmatprep.subr.bf16.mxu0 0
        %566 = vmatpush1.bf16.xpose.msra.mxu0 0
        %567 = vmatprep.subr.bf16.mxu0 0
        %568 = vmatpush1.bf16.xpose.msra.mxu0 0
        %569 = vmatprep.subr.bf16.mxu0 0
        %570 = vmatpush1.bf16.xpose.msra.mxu0 0
        %571 = vmatprep.subr.bf16.mxu0 0
        %572 = vmatpush1.bf16.xpose.msra.mxu0 0
        %573 = vmatprep.subr.bf16.mxu0 0
        %574 = vmatpush1.bf16.xpose.msra.mxu0 0
        %575 = vmatprep.subr.bf16.mxu0 0
        %576 = vmatpush1.bf16.xpose.msra.mxu0 0
        %577 = vmatprep.mubr.bf16.mxu0 0
        %578 = vmatmul.mubr.bf16.gmra.mrb[0].mxu0 %v540
        %v579 = vpop.f32.mrb[0].mxu0
        %v580 = vadd.f32 0.0, %v579
        %v581 = vpop.f32.mrb[0].mxu0
        %v582 = vpop.f32.mrb[0].mxu0
        %v583 = vpop.f32.mrb[0].mxu0
        %584 = vdwg.mxu0
        %v585 = vsel %vm538, %v580, -inf
        %586 = vmax.xlane.f32.xlu0 %v585
        %v587 = vpop.xlane.xlu0 %586
        %v588 = vsub.f32 %v580, %v587
        %v589 = vmul.f32 %v588, 1.442695
        %v590 = vpow.pop %v589
        %v591 = vsel %vm538, %v590, 0.0
        %592 = vadd.xlane.f32.xlu0 %v591
        %v593 = vpop.xlane.xlu0 %592
        %v594 = vrcp.pop %v593
        %v595 = vmul.f32 %v590, %v594
        %v596 = vpack.c.bf16 %v595, %v595
        %v597 = vpack.c.bf16 %v531, %v531
        %v599 = vsel %vm538, %v596, 0
        %vm601 = vcmask 1043456
        %v603 = vsel %vm601, %v597, 0
        %605 = vmatprep.subr.bf16.mxu0 0
        %606 = vmatpush1.bf16.msra.mxu0 %v603
        %607 = vmatprep.subr.bf16.mxu0 0
        %608 = vmatpush1.bf16.msra.mxu0 0
        %609 = vmatprep.subr.bf16.mxu0 0
        %610 = vmatpush1.bf16.msra.mxu0 0
        %611 = vmatprep.subr.bf16.mxu0 0
        %612 = vmatpush1.bf16.msra.mxu0 0
        %613 = vmatprep.subr.bf16.mxu0 0
        %614 = vmatpush1.bf16.msra.mxu0 0
        %615 = vmatprep.subr.bf16.mxu0 0
        %616 = vmatpush1.bf16.msra.mxu0 0
        %617 = vmatprep.subr.bf16.mxu0 0
        %618 = vmatpush1.bf16.msra.mxu0 0
        %619 = vmatprep.subr.bf16.mxu0 0
        %620 = vmatpush1.bf16.msra.mxu0 0
        %621 = vmatprep.subr.bf16.mxu0 0
        %622 = vmatpush1.bf16.msra.mxu0 0
        %623 = vmatprep.subr.bf16.mxu0 0
        %624 = vmatpush1.bf16.msra.mxu0 0
        %625 = vmatprep.subr.bf16.mxu0 0
        %626 = vmatpush1.bf16.msra.mxu0 0
        %627 = vmatprep.subr.bf16.mxu0 0
        %628 = vmatpush1.bf16.msra.mxu0 0
        %629 = vmatprep.subr.bf16.mxu0 0
        %630 = vmatpush1.bf16.msra.mxu0 0
        %631 = vmatprep.subr.bf16.mxu0 0
        %632 = vmatpush1.bf16.msra.mxu0 0
        %633 = vmatprep.subr.bf16.mxu0 0
        %634 = vmatpush1.bf16.msra.mxu0 0
        %635 = vmatprep.subr.bf16.mxu0 0
        %636 = vmatpush1.bf16.msra.mxu0 0
        %637 = vmatprep.mubr.bf16.mxu0 0
        %638 = vmatmul.mubr.bf16.gmra.mrb[0].mxu0 %v599
        %v639 = vpop.f32.mrb[0].mxu0
        %v640 = vadd.f32 0.0, %v639
        %v641 = vpop.f32.mrb[0].mxu0
        %v642 = vpop.f32.mrb[0].mxu0
        %v643 = vpop.f32.mrb[0].mxu0
        %644 = vdwg.mxu0
        %645 = vst.msk [vmem:[#allocation2] sm:$0xff] %vm538, %v640
        %647 = vrot.lane.b32.xlu0 %v536, 120
        %v648 = vpop.permute.xlu0 %647
        %650 = vrot.lane.b32.xlu0 %v537, 120
        %v651 = vpop.permute.xlu0 %650
        %v653 = vsel %vm538, %v648, 0
        %v656 = vsel %vm538, %v651, 0
        %658 = vmatprep.subr.bf16.mxu0 0
        %659 = vmatpush1.bf16.xpose.msra.mxu0 %v656
        %660 = vmatprep.subr.bf16.mxu0 0
        %661 = vmatpush1.bf16.xpose.msra.mxu0 0
        %662 = vmatprep.subr.bf16.mxu0 0
        %663 = vmatpush1.bf16.xpose.msra.mxu0 0
        %664 = vmatprep.subr.bf16.mxu0 0
        %665 = vmatpush1.bf16.xpose.msra.mxu0 0
        %666 = vmatprep.subr.bf16.mxu0 0
        %667 = vmatpush1.bf16.xpose.msra.mxu0 0
        %668 = vmatprep.subr.bf16.mxu0 0
        %669 = vmatpush1.bf16.xpose.msra.mxu0 0
        %670 = vmatprep.subr.bf16.mxu0 0
        %671 = vmatpush1.bf16.xpose.msra.mxu0 0
        %672 = vmatprep.subr.bf16.mxu0 0
        %673 = vmatpush1.bf16.xpose.msra.mxu0 0
        %674 = vmatprep.subr.bf16.mxu0 0
        %675 = vmatpush1.bf16.xpose.msra.mxu0 0
        %676 = vmatprep.subr.bf16.mxu0 0
        %677 = vmatpush1.bf16.xpose.msra.mxu0 0
        %678 = vmatprep.subr.bf16.mxu0 0
        %679 = vmatpush1.bf16.xpose.msra.mxu0 0
        %680 = vmatprep.subr.bf16.mxu0 0
        %681 = vmatpush1.bf16.xpose.msra.mxu0 0
        %682 = vmatprep.subr.bf16.mxu0 0
        %683 = vmatpush1.bf16.xpose.msra.mxu0 0
        %684 = vmatprep.subr.bf16.mxu0 0
        %685 = vmatpush1.bf16.xpose.msra.mxu0 0
        %686 = vmatprep.subr.bf16.mxu0 0
        %687 = vmatpush1.bf16.xpose.msra.mxu0 0
        %688 = vmatprep.subr.bf16.mxu0 0
        %689 = vmatpush1.bf16.xpose.msra.mxu0 0
        %690 = vmatprep.mubr.bf16.mxu0 0
        %691 = vmatmul.mubr.bf16.gmra.mrb[0].mxu0 %v653
        %v692 = vpop.f32.mrb[0].mxu0
        %v693 = vadd.f32 0.0, %v692
        %v694 = vpop.f32.mrb[0].mxu0
        %v695 = vpop.f32.mrb[0].mxu0
        %v696 = vpop.f32.mrb[0].mxu0
        %697 = vdwg.mxu0
        %v698 = vsel %vm538, %v693, -inf
        %699 = vmax.xlane.f32.xlu0 %v698
        %v700 = vpop.xlane.xlu0 %699
        %v701 = vsub.f32 %v693, %v700
        %v702 = vmul.f32 %v701, 1.442695
        %v703 = vpow.pop %v702
        %v704 = vsel %vm538, %v703, 0.0
        %705 = vadd.xlane.f32.xlu0 %v704
        %v706 = vpop.xlane.xlu0 %705
        %v707 = vrcp.pop %v706
        %v708 = vmul.f32 %v703, %v707
        %v709 = vpack.c.bf16 %v708, %v708
        %711 = vrot.lane.b32.xlu0 %v597, 120
        %v712 = vpop.permute.xlu0 %711
        %v714 = vsel %vm538, %v709, 0
        %v717 = vsel %vm601, %v712, 0
        %719 = vmatprep.subr.bf16.mxu0 0
        %720 = vmatpush1.bf16.msra.mxu0 %v717
        %721 = vmatprep.subr.bf16.mxu0 0
        %722 = vmatpush1.bf16.msra.mxu0 0
        %723 = vmatprep.subr.bf16.mxu0 0
        %724 = vmatpush1.bf16.msra.mxu0 0
        %725 = vmatprep.subr.bf16.mxu0 0
        %726 = vmatpush1.bf16.msra.mxu0 0
        %727 = vmatprep.subr.bf16.mxu0 0
        %728 = vmatpush1.bf16.msra.mxu0 0
        %729 = vmatprep.subr.bf16.mxu0 0
        %730 = vmatpush1.bf16.msra.mxu0 0
        %731 = vmatprep.subr.bf16.mxu0 0
        %732 = vmatpush1.bf16.msra.mxu0 0
        %733 = vmatprep.subr.bf16.mxu0 0
        %734 = vmatpush1.bf16.msra.mxu0 0
        %735 = vmatprep.subr.bf16.mxu0 0
        %736 = vmatpush1.bf16.msra.mxu0 0
        %737 = vmatprep.subr.bf16.mxu0 0
        %738 = vmatpush1.bf16.msra.mxu0 0
        %739 = vmatprep.subr.bf16.mxu0 0
        %740 = vmatpush1.bf16.msra.mxu0 0
        %741 = vmatprep.subr.bf16.mxu0 0
        %742 = vmatpush1.bf16.msra.mxu0 0
        %743 = vmatprep.subr.bf16.mxu0 0
        %744 = vmatpush1.bf16.msra.mxu0 0
        %745 = vmatprep.subr.bf16.mxu0 0
        %746 = vmatpush1.bf16.msra.mxu0 0
        %747 = vmatprep.subr.bf16.mxu0 0
        %748 = vmatpush1.bf16.msra.mxu0 0
        %749 = vmatprep.subr.bf16.mxu0 0
        %750 = vmatpush1.bf16.msra.mxu0 0
        %751 = vmatprep.mubr.bf16.mxu0 0
        %752 = vmatmul.mubr.bf16.gmra.mrb[0].mxu0 %v714
        %v753 = vpop.f32.mrb[0].mxu0
        %v754 = vadd.f32 0.0, %v753
        %v755 = vpop.f32.mrb[0].mxu0
        %v756 = vpop.f32.mrb[0].mxu0
        %v757 = vpop.f32.mrb[0].mxu0
        %758 = vdwg.mxu0
        %760 = vrot.lane.b32.xlu0 %v754, 8
        %v761 = vpop.permute.xlu0 %760
        %vm763 = vcmask 130112
        %764 = vst.msk [vmem:[#allocation2] sm:$0xff] %vm763, %v761
        %765 = vrot.lane.b32.xlu0 %v536, 112
        %v766 = vpop.permute.xlu0 %765
        %767 = vrot.lane.b32.xlu0 %v537, 112
        %v768 = vpop.permute.xlu0 %767
        %v770 = vsel %vm538, %v766, 0
        %v773 = vsel %vm538, %v768, 0
        %775 = vmatprep.subr.bf16.mxu0 0
        %776 = vmatpush1.bf16.xpose.msra.mxu0 %v773
        %777 = vmatprep.subr.bf16.mxu0 0
        %778 = vmatpush1.bf16.xpose.msra.mxu0 0
        %779 = vmatprep.subr.bf16.mxu0 0
        %780 = vmatpush1.bf16.xpose.msra.mxu0 0
        %781 = vmatprep.subr.bf16.mxu0 0
        %782 = vmatpush1.bf16.xpose.msra.mxu0 0
        %783 = vmatprep.subr.bf16.mxu0 0
        %784 = vmatpush1.bf16.xpose.msra.mxu0 0
        %785 = vmatprep.subr.bf16.mxu0 0
        %786 = vmatpush1.bf16.xpose.msra.mxu0 0
        %787 = vmatprep.subr.bf16.mxu0 0
        %788 = vmatpush1.bf16.xpose.msra.mxu0 0
        %789 = vmatprep.subr.bf16.mxu0 0
        %790 = vmatpush1.bf16.xpose.msra.mxu0 0
        %791 = vmatprep.subr.bf16.mxu0 0
        %792 = vmatpush1.bf16.xpose.msra.mxu0 0
        %793 = vmatprep.subr.bf16.mxu0 0
        %794 = vmatpush1.bf16.xpose.msra.mxu0 0
        %795 = vmatprep.subr.bf16.mxu0 0
        %796 = vmatpush1.bf16.xpose.msra.mxu0 0
        %797 = vmatprep.subr.bf16.mxu0 0
        %798 = vmatpush1.bf16.xpose.msra.mxu0 0
        %799 = vmatprep.subr.bf16.mxu0 0
        %800 = vmatpush1.bf16.xpose.msra.mxu0 0
        %801 = vmatprep.subr.bf16.mxu0 0
        %802 = vmatpush1.bf16.xpose.msra.mxu0 0
        %803 = vmatprep.subr.bf16.mxu0 0
        %804 = vmatpush1.bf16.xpose.msra.mxu0 0
        %805 = vmatprep.subr.bf16.mxu0 0
        %806 = vmatpush1.bf16.xpose.msra.mxu0 0
        %807 = vmatprep.mubr.bf16.mxu0 0
        %808 = vmatmul.mubr.bf16.gmra.mrb[0].mxu0 %v770
        %v809 = vpop.f32.mrb[0].mxu0
        %v810 = vadd.f32 0.0, %v809
        %v811 = vpop.f32.mrb[0].mxu0
        %v812 = vpop.f32.mrb[0].mxu0
        %v813 = vpop.f32.mrb[0].mxu0
        %814 = vdwg.mxu0
        %v815 = vsel %vm538, %v810, -inf
        %816 = vmax.xlane.f32.xlu0 %v815
        %v817 = vpop.xlane.xlu0 %816
        %v818 = vsub.f32 %v810, %v817
        %v819 = vmul.f32 %v818, 1.442695
        %v820 = vpow.pop %v819
        %v821 = vsel %vm538, %v820, 0.0
        %822 = vadd.xlane.f32.xlu0 %v821
        %v823 = vpop.xlane.xlu0 %822
        %v824 = vrcp.pop %v823
        %v825 = vmul.f32 %v820, %v824
        %v826 = vpack.c.bf16 %v825, %v825
        %827 = vrot.lane.b32.xlu0 %v597, 112
        %v828 = vpop.permute.xlu0 %827
        %v830 = vsel %vm538, %v826, 0
        %v833 = vsel %vm601, %v828, 0
        %835 = vmatprep.subr.bf16.mxu0 0
        %836 = vmatpush1.bf16.msra.mxu0 %v833
        %837 = vmatprep.subr.bf16.mxu0 0
        %838 = vmatpush1.bf16.msra.mxu0 0
        %839 = vmatprep.subr.bf16.mxu0 0
        %840 = vmatpush1.bf16.msra.mxu0 0
        %841 = vmatprep.subr.bf16.mxu0 0
        %842 = vmatpush1.bf16.msra.mxu0 0
        %843 = vmatprep.subr.bf16.mxu0 0
        %844 = vmatpush1.bf16.msra.mxu0 0
        %845 = vmatprep.subr.bf16.mxu0 0
        %846 = vmatpush1.bf16.msra.mxu0 0
        %847 = vmatprep.subr.bf16.mxu0 0
        %848 = vmatpush1.bf16.msra.mxu0 0
        %849 = vmatprep.subr.bf16.mxu0 0
        %850 = vmatpush1.bf16.msra.mxu0 0
        %851 = vmatprep.subr.bf16.mxu0 0
        %852 = vmatpush1.bf16.msra.mxu0 0
        %853 = vmatprep.subr.bf16.mxu0 0
        %854 = vmatpush1.bf16.msra.mxu0 0
        %855 = vmatprep.subr.bf16.mxu0 0
        %856 = vmatpush1.bf16.msra.mxu0 0
        %857 = vmatprep.subr.bf16.mxu0 0
        %858 = vmatpush1.bf16.msra.mxu0 0
        %859 = vmatprep.subr.bf16.mxu0 0
        %860 = vmatpush1.bf16.msra.mxu0 0
        %861 = vmatprep.subr.bf16.mxu0 0
        %862 = vmatpush1.bf16.msra.mxu0 0
        %863 = vmatprep.subr.bf16.mxu0 0
        %864 = vmatpush1.bf16.msra.mxu0 0
        %865 = vmatprep.subr.bf16.mxu0 0
        %866 = vmatpush1.bf16.msra.mxu0 0
        %867 = vmatprep.mubr.bf16.mxu0 0
        %868 = vmatmul.mubr.bf16.gmra.mrb[0].mxu0 %v830
        %v869 = vpop.f32.mrb[0].mxu0
        %v870 = vadd.f32 0.0, %v869
        %v871 = vpop.f32.mrb[0].mxu0
        %v872 = vpop.f32.mrb[0].mxu0
        %v873 = vpop.f32.mrb[0].mxu0
        %874 = vdwg.mxu0
        %876 = vrot.lane.b32.xlu0 %v870, 16
        %v877 = vpop.permute.xlu0 %876
        %vm879 = vcmask 195712
        %880 = vst.msk [vmem:[#allocation2] sm:$0xff] %vm879, %v877
        %881 = vrot.lane.b32.xlu0 %v536, 104
        %v882 = vpop.permute.xlu0 %881
        %883 = vrot.lane.b32.xlu0 %v537, 104
        %v884 = vpop.permute.xlu0 %883
        %v886 = vsel %vm538, %v882, 0
        %v889 = vsel %vm538, %v884, 0
        %891 = vmatprep.subr.bf16.mxu0 0
        %892 = vmatpush1.bf16.xpose.msra.mxu0 %v889
        %893 = vmatprep.subr.bf16.mxu0 0
        %894 = vmatpush1.bf16.xpose.msra.mxu0 0
        %895 = vmatprep.subr.bf16.mxu0 0
        %896 = vmatpush1.bf16.xpose.msra.mxu0 0
        %897 = vmatprep.subr.bf16.mxu0 0
        %898 = vmatpush1.bf16.xpose.msra.mxu0 0
        %899 = vmatprep.subr.bf16.mxu0 0
        %900 = vmatpush1.bf16.xpose.msra.mxu0 0
        %901 = vmatprep.subr.bf16.mxu0 0
        %902 = vmatpush1.bf16.xpose.msra.mxu0 0
        %903 = vmatprep.subr.bf16.mxu0 0
        %904 = vmatpush1.bf16.xpose.msra.mxu0 0
        %905 = vmatprep.subr.bf16.mxu0 0
        %906 = vmatpush1.bf16.xpose.msra.mxu0 0
        %907 = vmatprep.subr.bf16.mxu0 0
        %908 = vmatpush1.bf16.xpose.msra.mxu0 0
        %909 = vmatprep.subr.bf16.mxu0 0
        %910 = vmatpush1.bf16.xpose.msra.mxu0 0
        %911 = vmatprep.subr.bf16.mxu0 0
        %912 = vmatpush1.bf16.xpose.msra.mxu0 0
        %913 = vmatprep.subr.bf16.mxu0 0
        %914 = vmatpush1.bf16.xpose.msra.mxu0 0
        %915 = vmatprep.subr.bf16.mxu0 0
        %916 = vmatpush1.bf16.xpose.msra.mxu0 0
        %917 = vmatprep.subr.bf16.mxu0 0
        %918 = vmatpush1.bf16.xpose.msra.mxu0 0
        %919 = vmatprep.subr.bf16.mxu0 0
        %920 = vmatpush1.bf16.xpose.msra.mxu0 0
        %921 = vmatprep.subr.bf16.mxu0 0
        %922 = vmatpush1.bf16.xpose.msra.mxu0 0
        %923 = vmatprep.mubr.bf16.mxu0 0
        %924 = vmatmul.mubr.bf16.gmra.mrb[0].mxu0 %v886
        %v925 = vpop.f32.mrb[0].mxu0
        %v926 = vadd.f32 0.0, %v925
        %v927 = vpop.f32.mrb[0].mxu0
        %v928 = vpop.f32.mrb[0].mxu0
        %v929 = vpop.f32.mrb[0].mxu0
        %930 = vdwg.mxu0
        %v931 = vsel %vm538, %v926, -inf
        %932 = vmax.xlane.f32.xlu0 %v931
        %v933 = vpop.xlane.xlu0 %932
        %v934 = vsub.f32 %v926, %v933
        %v935 = vmul.f32 %v934, 1.442695
        %v936 = vpow.pop %v935
        %v937 = vsel %vm538, %v936, 0.0
        %938 = vadd.xlane.f32.xlu0 %v937
        %v939 = vpop.xlane.xlu0 %938
        %v940 = vrcp.pop %v939
        %v941 = vmul.f32 %v936, %v940
        %v942 = vpack.c.bf16 %v941, %v941
        %943 = vrot.lane.b32.xlu0 %v597, 104
        %v944 = vpop.permute.xlu0 %943
        %v946 = vsel %vm538, %v942, 0
        %v949 = vsel %vm601, %v944, 0
        %951 = vmatprep.subr.bf16.mxu0 0
        %952 = vmatpush1.bf16.msra.mxu0 %v949
        %953 = vmatprep.subr.bf16.mxu0 0
        %954 = vmatpush1.bf16.msra.mxu0 0
        %955 = vmatprep.subr.bf16.mxu0 0
        %956 = vmatpush1.bf16.msra.mxu0 0
        %957 = vmatprep.subr.bf16.mxu0 0
        %958 = vmatpush1.bf16.msra.mxu0 0
        %959 = vmatprep.subr.bf16.mxu0 0
        %960 = vmatpush1.bf16.msra.mxu0 0
        %961 = vmatprep.subr.bf16.mxu0 0
        %962 = vmatpush1.bf16.msra.mxu0 0
        %963 = vmatprep.subr.bf16.mxu0 0
        %964 = vmatpush1.bf16.msra.mxu0 0
        %965 = vmatprep.subr.bf16.mxu0 0
        %966 = vmatpush1.bf16.msra.mxu0 0
        %967 = vmatprep.subr.bf16.mxu0 0
        %968 = vmatpush1.bf16.msra.mxu0 0
        %969 = vmatprep.subr.bf16.mxu0 0
        %970 = vmatpush1.bf16.msra.mxu0 0
        %971 = vmatprep.subr.bf16.mxu0 0
        %972 = vmatpush1.bf16.msra.mxu0 0
        %973 = vmatprep.subr.bf16.mxu0 0
        %974 = vmatpush1.bf16.msra.mxu0 0
        %975 = vmatprep.subr.bf16.mxu0 0
        %976 = vmatpush1.bf16.msra.mxu0 0
        %977 = vmatprep.subr.bf16.mxu0 0
        %978 = vmatpush1.bf16.msra.mxu0 0
        %979 = vmatprep.subr.bf16.mxu0 0
        %980 = vmatpush1.bf16.msra.mxu0 0
        %981 = vmatprep.subr.bf16.mxu0 0
        %982 = vmatpush1.bf16.msra.mxu0 0
        %983 = vmatprep.mubr.bf16.mxu0 0
        %984 = vmatmul.mubr.bf16.gmra.mrb[0].mxu0 %v946
        %v985 = vpop.f32.mrb[0].mxu0
        %v986 = vadd.f32 0.0, %v985
        %v987 = vpop.f32.mrb[0].mxu0
        %v988 = vpop.f32.mrb[0].mxu0
        %v989 = vpop.f32.mrb[0].mxu0
        %990 = vdwg.mxu0
        %992 = vrot.lane.b32.xlu0 %v986, 24
        %v993 = vpop.permute.xlu0 %992
        %vm995 = vcmask 261312
        %996 = vst.msk [vmem:[#allocation2] sm:$0xff] %vm995, %v993
        %v997 = vld [vmem:[#allocation2] sm:$0xff]
        %998 = vst.msk [vmem:[%s325] sm:$0xff] %vm352, %v997
        %s999 = sand.u32 %s154, 1
        %s1000 = scalar_lea.sflag [#allocation5], %s999
        %s1001 = sand.u32 %s154, 1
        %s1002 = smul.addr %s1001, 8
        %s1003 = scalar_lea.vmem [#allocation11], %s1002
        // Predicated region
        $region57: #{tpu_custom_call.1} parent=39 // pred_check
          %p1004 = pneg %p164
        $region58: #{tpu_custom_call.1} parent=39 // pred_check_branch
          %1006 = sbr.rel (%p1004) target = $region60
        $region59: #{tpu_custom_call.1} parent=39 // pred_region
          %s1008 = ssub.s32 128, 128
          %1009 = vsyncadd %s1000, %s1008
          %s1010 = smul.addr %s26, 128
          %s1011 = scalar_lea.hbm %s5, %s1010
          %s1013 = sshll.u32 %s1003, 4
          %s1014 = int_to_ptr.vmem [resolvable:$true] %s1013
          %1016 = dma.vmem_to_hbm [thread:$0]  %s1014, 128, %s1011, %s1000
        $region60: #{tpu_custom_call.1} parent=39 // pred_fallthru
          _
      $region40: #{tpu_custom_call.1} parent=5 // pred_fallthru
        _
      %p1017 = scmp.le.s32.totalorder 2, %s21
      // Predicated region
      $region61: #{tpu_custom_call.1} parent=5 // pred_check
        %p1018 = pneg %p1017
      $region62: #{tpu_custom_call.1} parent=5 // pred_check_branch
        %1020 = sbr.rel (%p1018) target = $region64
      $region63: #{tpu_custom_call.1} parent=5 // pred_region
        %s1021 = ssub.s32 %s21, 2
        // Predicated region
        $region65: #{tpu_custom_call.1} parent=63 // pred_check
          %p1022 = pneg %p170
        $region66: #{tpu_custom_call.1} parent=63 // pred_check_branch
          %1024 = sbr.rel (%p1022) target = $region68
        $region67: #{tpu_custom_call.1} parent=63 // pred_region
          %s1025 = sand.u32 %s155, 1
          %s1026 = scalar_lea.sflag [#allocation5], %s1025
          %s1027 = sand.u32 %s155, 1
          %s1028 = smul.addr %s1027, 8
          %s1029 = scalar_lea.vmem [#allocation11], %s1028
          %1030 = dma.done %s1026, 128
        $region68: #{tpu_custom_call.1} parent=63 // pred_fallthru
          _
      $region64: #{tpu_custom_call.1} parent=5 // pred_fallthru
        _
    $region6: #{tpu_custom_call.1} parent=1 // loop_footer
      %s25 = sadd.s32 1, %s21
    $region7: #{tpu_custom_call.1} parent=1 // loop_footer_branch
      %20 = sbr.rel target = $region3
    $region8: #{tpu_custom_call.1} parent=1 // loop_exit
      _
    %1031 = vsyncpa [#allocation4], 1
    %s1032 = scalar_lea.sflag [#allocation4], 1
    %1033 = vsyncpa %s1032, 1
    %1034 = vsyncpa [#allocation7], 1
    %s1035 = scalar_lea.sflag [#allocation7], 1
    %1036 = vsyncpa %s1035, 1
    %1037 = vsyncpa [#allocation10], 1
    %1038 = vsyncpa [#allocation5], 1
    %s1039 = scalar_lea.sflag [#allocation5], 1
    %1040 = vsyncpa %s1039, 1

</llo_original>
